<compile_context>
chip_gen: v6e
topology: v6e:2x2x1
jax: 0.10.0
libtpu: 0.0.40
codegen_flags: <defaults>
</compile_context>

<pallas_src>
import jax
import jax.numpy as jnp
import numpy as np
from jax import lax
from jax.experimental import pallas as pl
from jax.experimental.pallas import tpu as pltpu


def ner_tagger_kernel(tok_ref, side_ref, w_ref, b_ref,
                      wemb_ref, logits_ref, aux_ref):
    Bt, S, H = tok_ref.shape
    W = side_ref.shape[1]
    T = w_ref.shape[1]
    BW = Bt * W
    f32 = jnp.float32

    # Hoisted iotas / constants (JAX does not CSE broadcast_in_dim in loops).
    s_idx = lax.broadcasted_iota(jnp.int32, (W, S), 1)        # sub-token positions
    t_idx = lax.broadcasted_iota(jnp.int32, (BW, T), 1)       # tag indices
    lane2 = lax.broadcasted_iota(jnp.int32, (BW, 2), 1)
    eye2 = (lax.broadcasted_iota(jnp.int32, (2, 2), 0) ==
            lax.broadcasted_iota(jnp.int32, (2, 2), 1)).astype(f32)

    # ---- avg word pooling, one sentence at a time (masked matmul on the MXU):
    #      word_emb[w, :] = (1/span_len[w]) * sum_{s in span(w)} tok[s, :]
    for i in range(Bt):
        side_i = side_ref[i]                                  # (W, 4) int32
        start = side_i[:, 0:1]                                # (W, 1)
        end = side_i[:, 1:2]                                  # (W, 1)
        span_mask = (s_idx >= start) & (s_idx <= end)         # (W, S) bool
        span_mask = span_mask.astype(f32).astype(tok_ref.dtype)  # exact 0/1
        inv_len = 1.0 / (end - start + 1).astype(f32)         # (W, 1)
        we = jnp.dot(span_mask, tok_ref[i],
                     preferred_element_type=f32) * inv_len    # (W, H) f32
        # dropout: nn.Dropout in eval mode is the identity (inference forward).
        wemb_ref[i] = we.astype(wemb_ref.dtype)

    # ---- classifier head, fused over all Bt sentences (weights are shared)
    #      into a single (Bt*W, H) x (H, T) MXU matmul.
    wemb_all = wemb_ref[...].astype(f32).reshape(BW, H)
    logits_all = jnp.dot(wemb_all, w_ref[...],
                         preferred_element_type=f32) + b_ref[...]   # (BW, T)
    logits_ref[...] = logits_all.reshape(Bt, W, T)            # one dense store

    # ---- argmax decode + weighted masked NLL, fused over all Bt*W words.
    side_all = side_ref[...].reshape(BW, 4)
    labels = side_all[:, 2:3]                                 # (BW, 1) int32
    wts = pltpu.bitcast(side_all[:, 3:4], f32)                # (BW, 1) f32

    mx = jnp.max(logits_all, axis=-1, keepdims=True)          # (BW, 1)
    # argmax with first-max tie breaking (use_crf = False branch)
    dec = jnp.min(jnp.where(logits_all == mx, t_idx, T),
                  axis=-1, keepdims=True)                     # (BW, 1) int32
    lse = mx + jnp.log(jnp.sum(jnp.exp(logits_all - mx),
                               axis=-1, keepdims=True))       # (BW, 1)
    pad = labels < 0
    onehot = (t_idx == jnp.maximum(labels, 0)).astype(f32)
    picked = jnp.sum((logits_all - lse) * onehot, axis=-1, keepdims=True)
    nll = jnp.where(pad, 0.0, -picked * wts)                  # (BW, 1)

    # Pack [decode, nll] and flip each sentence to a lane-dense (2, W) row pair
    # with a tiny exact NT matmul (out[j, w] = pair[w, j]); avoids last-dim-1
    # masked partial stores on the small per-word outputs.
    pair = jnp.where(lane2 == 0, dec.astype(f32), nll)        # (BW, 2)
    for i in range(Bt):
        aux_ref[i] = lax.dot_general(
            eye2, pair[i * W:(i + 1) * W, :],                 # static slice
            dimension_numbers=(((1,), (1,)), ((), ())),
            preferred_element_type=f32)                       # (2, W)


def _block_bytes(bt, S, H, W, T, tok_bytes):
    return bt * (S * H * tok_bytes      # token_emb block (in)
                 + W * 4 * 4            # packed side block (in)
                 + W * H * tok_bytes    # word_emb block (out)
                 + W * T * 4            # logits block (out)
                 + 2 * W * 4)           # aux block (out)


def _pick_block_batch(B, S, H, W, T, tok_bytes, budget=8 * 1024 * 1024):
    """Largest divisor of B (<=16) whose double-buffered block fits the budget."""
    bt = 1
    for cand in range(1, min(B, 16) + 1):
        if B % cand == 0 and 2 * _block_bytes(cand, S, H, W, T, tok_bytes) <= budget:
            bt = cand
    return bt


def ner_tagger_forward(token_emb, word_to_piece_inds, word_to_piece_ends,
                       sent_lens, labels, weights, cls_w, cls_b,
                       batch_block=None):
    """Returns (type_logits, decodeIdx, word_emb, loss) like NERTagger.forward."""
    del sent_lens  # only used by the CRF decode path (use_crf=False here)
    B, S, H = token_emb.shape
    W = word_to_piece_inds.shape[1]
    T = cls_w.shape[0]
    tok_dtype = token_emb.dtype
    tok_bytes = jnp.dtype(tok_dtype).itemsize

    bt = (_pick_block_batch(B, S, H, W, T, tok_bytes)
          if batch_block is None else batch_block)
    if B % bt != 0:
        raise ValueError("batch_block must divide the batch size")

    w_ht = cls_w.T.astype(jnp.float32)                 # (H, T)
    b_2d = cls_b.reshape(1, T).astype(jnp.float32)     # (1, T)

    # Pack start/end/label/bitcast(weight) into a single (B, W, 4) int32 array.
    w_bits = lax.bitcast_convert_type(weights.astype(jnp.float32), jnp.int32)
    side = jnp.stack([word_to_piece_inds.astype(jnp.int32),
                      word_to_piece_ends.astype(jnp.int32),
                      labels.astype(jnp.int32),
                      w_bits], axis=-1)                 # (B, W, 4)

    out_shapes = (
        jax.ShapeDtypeStruct((B, W, H), tok_dtype),     # word_emb (native dtype)
        jax.ShapeDtypeStruct((B, W, T), jnp.float32),   # type_logits
        jax.ShapeDtypeStruct((B, 2, W), jnp.float32),   # [decode, nll] lane-dense
    )

    grid_spec = pltpu.PrefetchScalarGridSpec(
        num_scalar_prefetch=0,
        grid=(B // bt,),
        in_specs=[
            pl.BlockSpec((bt, S, H), lambda b: (b, 0, 0)),   # token_emb
            pl.BlockSpec((bt, W, 4), lambda b: (b, 0, 0)),   # packed side inputs
            pl.BlockSpec((H, T), lambda b: (0, 0)),          # cls weight (H, T)
            pl.BlockSpec((1, T), lambda b: (0, 0)),          # cls bias
        ],
        out_specs=[
            pl.BlockSpec((bt, W, H), lambda b: (b, 0, 0)),
            pl.BlockSpec((bt, W, T), lambda b: (b, 0, 0)),
            pl.BlockSpec((bt, 2, W), lambda b: (b, 0, 0)),
        ],
    )

    # Explicit VMEM limit only when blocks are big enough to need it.
    est = 2 * _block_bytes(bt, S, H, W, T, tok_bytes) + (H * T + T) * 4
    vmem_limit = None
    if est > (16 << 20):
        vmem_limit = int(min(est * 3 // 2 + (4 << 20), 112 << 20))

    word_emb, logits, aux = pl.pallas_call(
        ner_tagger_kernel,
        out_shape=out_shapes,
        grid_spec=grid_spec,
        compiler_params=pltpu.CompilerParams(
            dimension_semantics=("parallel",),
            vmem_limit_bytes=vmem_limit),
    )(token_emb, side, w_ht, b_2d)

    decode = aux[:, 0, :].astype(jnp.int32)              # (B, W)
    nll_per_word = aux[:, 1, :]                          # (B, W) masked+weighted
    num_active = jnp.sum((labels >= 0).astype(jnp.float32))
    loss = jnp.sum(nll_per_word) / num_active            # sum(nll) / num_active
    return logits, decode, word_emb, loss
    # TODO(synk): LinearCRF decode (use_crf=True) not implemented -- class
    # source not provided; argmax decode path is used, matching use_crf=False.


def reference_forward(token_emb, start, end, labels, weights, cls_w, cls_b):
    f32 = jnp.float32
    S = token_emb.shape[1]
    s_idx = jnp.arange(S)[None, None, :]
    mask = (s_idx >= start[:, :, None]) & (s_idx <= end[:, :, None])
    span_len = (end - start + 1).astype(f32)
    we = jnp.einsum("bws,bsh->bwh",
                    mask.astype(f32).astype(token_emb.dtype), token_emb,
                    preferred_element_type=f32,
                    precision=jax.lax.Precision.HIGHEST)
    we = we * (1.0 / span_len)[..., None]
    word_emb = we.astype(token_emb.dtype)
    logits = jnp.einsum("bwh,th->bwt", word_emb.astype(f32), cls_w.astype(f32),
                        precision=jax.lax.Precision.HIGHEST) + cls_b
    lsm = jax.nn.log_softmax(logits, axis=-1)
    pad = labels < 0
    lab_c = jnp.maximum(labels, 0)
    nll = -jnp.take_along_axis(lsm, lab_c[..., None], axis=-1)[..., 0]
    nll = jnp.where(pad, 0.0, nll * weights)
    loss = nll.sum() / (labels >= 0).sum()
    decode = jnp.argmax(logits, axis=-1)
    return logits, decode, word_emb, loss


if __name__ == "__main__":
    # Small shapes consistent with NERTagger.forward
    B, S, W, H, T = 2, 16, 8, 32, 9   # batch, sub-word pieces, words, hidden, tags

    key = jax.random.PRNGKey(0)
    k_tok, k_w, k_lab, k_wt = jax.random.split(key, 4)

    # bf16 encoder hidden states: DMA'd natively (no wrapper f32 upcast).
    token_emb = jax.random.normal(k_tok, (B, S, H),
                                  dtype=jnp.float32).astype(jnp.bfloat16)

    # Deterministic non-overlapping word -> sub-token spans covering the sequence.
    span_lens = np.array([1, 2, 1, 3, 2, 1, 2, 4], dtype=np.int32)   # sums to 16
    starts = np.concatenate([[0], np.cumsum(span_lens)[:-1]]).astype(np.int32)
    ends = (starts + span_lens - 1).astype(np.int32)
    word_to_piece_inds = jnp.asarray(np.tile(starts, (B, 1)))        # (B, W)
    word_to_piece_ends = jnp.asarray(np.tile(ends, (B, 1)))          # (B, W)
    sent_lens = jnp.full((B,), W, dtype=jnp.int32)

    labels = jax.random.randint(k_lab, (B, W), 0, T, dtype=jnp.int32)
    labels = labels.at[1, W - 1].set(-1)          # padded labels (ignored)
    labels = labels.at[0, W - 2].set(-1)
    weights = jax.random.uniform(k_wt, (B, W), dtype=jnp.float32,
                                 minval=0.5, maxval=1.5)

    # nn.Linear(hidden_size, num_tag), init_params(): normal(0, 0.02) weight, 0 bias
    cls_w = 0.02 * jax.random.normal(k_w, (T, H), dtype=jnp.float32)
    cls_b = jnp.zeros((T,), dtype=jnp.float32)

    outs = ner_tagger_forward(token_emb, word_to_piece_inds, word_to_piece_ends,
                              sent_lens, labels, weights, cls_w, cls_b)
    outs = jax.block_until_ready(outs)
    logits, decode, word_emb, loss = outs

    ref_logits, ref_decode, ref_wemb, ref_loss = reference_forward(
        token_emb, word_to_piece_inds, word_to_piece_ends, labels, weights,
        cls_w, cls_b)

    # word_emb / logits: bf16-pipeline tolerances.
    np.testing.assert_allclose(np.asarray(word_emb.astype(jnp.float32)),
                               np.asarray(ref_wemb.astype(jnp.float32)),
                               rtol=2e-2, atol=2e-2)
    np.testing.assert_allclose(np.asarray(logits), np.asarray(ref_logits),
                               rtol=1e-2, atol=1e-3)
    # decode: exact first-max argmax of the kernel's own logits, plus agreement
    # with the reference wherever the reference top-2 gap is unambiguous.
    np.testing.assert_array_equal(np.asarray(decode),
                                  np.argmax(np.asarray(logits), axis=-1))
    srt = np.sort(np.asarray(ref_logits), axis=-1)
    sure = (srt[..., -1] - srt[..., -2]) > 1e-3
    np.testing.assert_array_equal(np.asarray(decode)[sure],
                                  np.asarray(ref_decode)[sure])
    np.testing.assert_allclose(float(loss), float(ref_loss),
                               rtol=1e-3, atol=1e-5)

    print("KERNEL_OK")
</pallas_src>

<mosaic_0001>
module attributes {stable_mosaic.version = 11 : i64} {
  func.func @ner_tagger_kernel(%arg0: i32, %arg1: memref<2x16x32xbf16, #tpu.memory_space<vmem>>, %arg2: memref<2x8x4xi32, #tpu.memory_space<vmem>>, %arg3: memref<32x9xf32, #tpu.memory_space<vmem>>, %arg4: memref<1x9xf32, #tpu.memory_space<vmem>>, %arg5: memref<2x8x32xbf16, #tpu.memory_space<vmem>>, %arg6: memref<2x8x9xf32, #tpu.memory_space<vmem>>, %arg7: memref<2x2x8xf32, #tpu.memory_space<vmem>>) attributes {dimension_semantics = [#tpu.dimension_semantics<parallel>], iteration_bounds = array<i64: 1>, scalar_prefetch = 0 : i64, scratch_operands = 0 : i64, tpu.core_type = #tpu.core_type<tc>, window_params = [{transform_indices = @transform_0, window_bounds = array<i64: 2, 16, 32>}, {transform_indices = @transform_1, window_bounds = array<i64: 2, 8, 4>}, {pipeline_mode = #tpu.pipeline_mode<synchronous>, transform_indices = @transform_2, window_bounds = array<i64: 32, 9>}, {pipeline_mode = #tpu.pipeline_mode<synchronous>, transform_indices = @transform_3, window_bounds = array<i64: 1, 9>}, {transform_indices = @transform_4, window_bounds = array<i64: 2, 8, 32>}, {transform_indices = @transform_5, window_bounds = array<i64: 2, 8, 9>}, {transform_indices = @transform_6, window_bounds = array<i64: 2, 2, 8>}]} {
    %0 = tpu.iota {dimensions = array<i32: 1>} : vector<8x16xi32>
    %1 = tpu.iota {dimensions = array<i32: 1>} : vector<16x9xi32>
    %2 = tpu.iota {dimensions = array<i32: 1>} : vector<16x2xi32>
    %3 = tpu.iota {dimensions = array<i32: 0>} : vector<2x2xi32>
    %4 = tpu.iota {dimensions = array<i32: 1>} : vector<2x2xi32>
    %5 = arith.cmpi eq, %3, %4 : vector<2x2xi32>
    %6 = arith.extui %5 : vector<2x2xi1> to vector<2x2xi32>
    %7 = arith.sitofp %6 : vector<2x2xi32> to vector<2x2xf32>
    %c0 = arith.constant 0 : index
    %c0_0 = arith.constant 0 : index
    %c0_1 = arith.constant 0 : index
    %8 = vector.load %arg2[%c0, %c0_0, %c0_1] : memref<2x8x4xi32, #tpu.memory_space<vmem>>, vector<1x8x4xi32>
    %9 = vector.shape_cast %8 : vector<1x8x4xi32> to vector<8x4xi32>
    %10 = vector.extract_strided_slice %9 {offsets = [0, 0], sizes = [8, 1], strides = [1, 1]} : vector<8x4xi32> to vector<8x1xi32>
    %11 = vector.extract_strided_slice %9 {offsets = [0, 1], sizes = [8, 1], strides = [1, 1]} : vector<8x4xi32> to vector<8x1xi32>
    %12 = vector.broadcast %10 : vector<8x1xi32> to vector<8x16xi32>
    %13 = arith.cmpi sge, %0, %12 : vector<8x16xi32>
    %14 = vector.broadcast %11 : vector<8x1xi32> to vector<8x16xi32>
    %15 = arith.cmpi sle, %0, %14 : vector<8x16xi32>
    %16 = arith.andi %13, %15 : vector<8x16xi1>
    %17 = arith.extui %16 : vector<8x16xi1> to vector<8x16xi32>
    %18 = arith.sitofp %17 : vector<8x16xi32> to vector<8x16xf32>
    %19 = arith.truncf %18 : vector<8x16xf32> to vector<8x16xbf16>
    %20 = arith.subi %11, %10 : vector<8x1xi32>
    %c1_i32 = arith.constant 1 : i32
    %21 = vector.broadcast %c1_i32 : i32 to vector<8x1xi32>
    %22 = arith.addi %20, %21 : vector<8x1xi32>
    %23 = arith.sitofp %22 : vector<8x1xi32> to vector<8x1xf32>
    %cst = arith.constant 1.000000e+00 : f32
    %24 = vector.broadcast %cst : f32 to vector<8x1xf32>
    %25 = arith.divf %24, %23 : vector<8x1xf32>
    %c0_2 = arith.constant 0 : index
    %c0_3 = arith.constant 0 : index
    %c0_4 = arith.constant 0 : index
    %26 = vector.load %arg1[%c0_2, %c0_3, %c0_4] : memref<2x16x32xbf16, #tpu.memory_space<vmem>>, vector<1x16x32xbf16>
    %27 = vector.shape_cast %26 : vector<1x16x32xbf16> to vector<16x32xbf16>
    %cst_5 = arith.constant dense<0.000000e+00> : vector<8x32xf32>
    %28 = tpu.matmul %19, %27, %cst_5 {dimension_numbers = #tpu.dot_dimension_numbers<[1], [0], [0], [1], [0, 0, 1, 1], [], []>} : vector<8x16xbf16>, vector<16x32xbf16>, vector<8x32xf32> -> vector<8x32xf32>
    %29 = vector.broadcast %25 : vector<8x1xf32> to vector<8x32xf32>
    %30 = arith.mulf %28, %29 : vector<8x32xf32>
    %31 = arith.truncf %30 : vector<8x32xf32> to vector<8x32xbf16>
    %c0_6 = arith.constant 0 : index
    %c0_7 = arith.constant 0 : index
    %c0_8 = arith.constant 0 : index
    %32 = vector.load %arg5[%c0_6, %c0_7, %c0_8] : memref<2x8x32xbf16, #tpu.memory_space<vmem>>, vector<1x8x32xbf16>
    %33 = vector.shape_cast %32 : vector<1x8x32xbf16> to vector<8x32xbf16>
    %34 = vector.shape_cast %31 : vector<8x32xbf16> to vector<1x8x32xbf16>
    tpu.vector_store %arg5[%c0_6, %c0_7, %c0_8], %34 {strides = array<i32>} : memref<2x8x32xbf16, #tpu.memory_space<vmem>>, vector<1x8x32xbf16>,
    %c1 = arith.constant 1 : index
    %c0_9 = arith.constant 0 : index
    %c0_10 = arith.constant 0 : index
    %35 = vector.load %arg2[%c1, %c0_9, %c0_10] : memref<2x8x4xi32, #tpu.memory_space<vmem>>, vector<1x8x4xi32>
    %36 = vector.shape_cast %35 : vector<1x8x4xi32> to vector<8x4xi32>
    %37 = vector.extract_strided_slice %36 {offsets = [0, 0], sizes = [8, 1], strides = [1, 1]} : vector<8x4xi32> to vector<8x1xi32>
    %38 = vector.extract_strided_slice %36 {offsets = [0, 1], sizes = [8, 1], strides = [1, 1]} : vector<8x4xi32> to vector<8x1xi32>
    %39 = vector.broadcast %37 : vector<8x1xi32> to vector<8x16xi32>
    %40 = arith.cmpi sge, %0, %39 : vector<8x16xi32>
    %41 = vector.broadcast %38 : vector<8x1xi32> to vector<8x16xi32>
    %42 = arith.cmpi sle, %0, %41 : vector<8x16xi32>
    %43 = arith.andi %40, %42 : vector<8x16xi1>
    %44 = arith.extui %43 : vector<8x16xi1> to vector<8x16xi32>
    %45 = arith.sitofp %44 : vector<8x16xi32> to vector<8x16xf32>
    %46 = arith.truncf %45 : vector<8x16xf32> to vector<8x16xbf16>
    %47 = arith.subi %38, %37 : vector<8x1xi32>
    %c1_i32_11 = arith.constant 1 : i32
    %48 = vector.broadcast %c1_i32_11 : i32 to vector<8x1xi32>
    %49 = arith.addi %47, %48 : vector<8x1xi32>
    %50 = arith.sitofp %49 : vector<8x1xi32> to vector<8x1xf32>
    %cst_12 = arith.constant 1.000000e+00 : f32
    %51 = vector.broadcast %cst_12 : f32 to vector<8x1xf32>
    %52 = arith.divf %51, %50 : vector<8x1xf32>
    %c1_13 = arith.constant 1 : index
    %c0_14 = arith.constant 0 : index
    %c0_15 = arith.constant 0 : index
    %53 = vector.load %arg1[%c1_13, %c0_14, %c0_15] : memref<2x16x32xbf16, #tpu.memory_space<vmem>>, vector<1x16x32xbf16>
    %54 = vector.shape_cast %53 : vector<1x16x32xbf16> to vector<16x32xbf16>
    %cst_16 = arith.constant dense<0.000000e+00> : vector<8x32xf32>
    %55 = tpu.matmul %46, %54, %cst_16 {dimension_numbers = #tpu.dot_dimension_numbers<[1], [0], [0], [1], [0, 0, 1, 1], [], []>} : vector<8x16xbf16>, vector<16x32xbf16>, vector<8x32xf32> -> vector<8x32xf32>
    %56 = vector.broadcast %52 : vector<8x1xf32> to vector<8x32xf32>
    %57 = arith.mulf %55, %56 : vector<8x32xf32>
    %58 = arith.truncf %57 : vector<8x32xf32> to vector<8x32xbf16>
    %c1_17 = arith.constant 1 : index
    %c0_18 = arith.constant 0 : index
    %c0_19 = arith.constant 0 : index
    %59 = vector.load %arg5[%c1_17, %c0_18, %c0_19] : memref<2x8x32xbf16, #tpu.memory_space<vmem>>, vector<1x8x32xbf16>
    %60 = vector.shape_cast %59 : vector<1x8x32xbf16> to vector<8x32xbf16>
    %61 = vector.shape_cast %58 : vector<8x32xbf16> to vector<1x8x32xbf16>
    tpu.vector_store %arg5[%c1_17, %c0_18, %c0_19], %61 {strides = array<i32>} : memref<2x8x32xbf16, #tpu.memory_space<vmem>>, vector<1x8x32xbf16>,
    %c0_20 = arith.constant 0 : index
    %c0_21 = arith.constant 0 : index
    %c0_22 = arith.constant 0 : index
    %62 = vector.load %arg5[%c0_20, %c0_21, %c0_22] : memref<2x8x32xbf16, #tpu.memory_space<vmem>>, vector<2x8x32xbf16>
    %63 = arith.extf %62 : vector<2x8x32xbf16> to vector<2x8x32xf32>
    %64 = vector.shape_cast %63 : vector<2x8x32xf32> to vector<16x32xf32>
    %c0_23 = arith.constant 0 : index
    %c0_24 = arith.constant 0 : index
    %65 = vector.load %arg3[%c0_23, %c0_24] : memref<32x9xf32, #tpu.memory_space<vmem>>, vector<32x9xf32>
    %cst_25 = arith.constant dense<0.000000e+00> : vector<16x9xf32>
    %66 = tpu.matmul %64, %65, %cst_25 {dimension_numbers = #tpu.dot_dimension_numbers<[1], [0], [0], [1], [0, 0, 1, 1], [], []>} : vector<16x32xf32>, vector<32x9xf32>, vector<16x9xf32> -> vector<16x9xf32>
    %c0_26 = arith.constant 0 : index
    %c0_27 = arith.constant 0 : index
    %67 = vector.load %arg4[%c0_26, %c0_27] : memref<1x9xf32, #tpu.memory_space<vmem>>, vector<1x9xf32>
    %68 = vector.broadcast %67 : vector<1x9xf32> to vector<16x9xf32>
    %69 = arith.addf %66, %68 : vector<16x9xf32>
    %70 = vector.shape_cast %69 : vector<16x9xf32> to vector<2x8x9xf32>
    %c0_28 = arith.constant 0 : index
    %c0_29 = arith.constant 0 : index
    %c0_30 = arith.constant 0 : index
    %71 = vector.load %arg6[%c0_28, %c0_29, %c0_30] : memref<2x8x9xf32, #tpu.memory_space<vmem>>, vector<2x8x9xf32>
    tpu.vector_store %arg6[%c0_28, %c0_29, %c0_30], %70 {strides = array<i32>} : memref<2x8x9xf32, #tpu.memory_space<vmem>>, vector<2x8x9xf32>,
    %c0_31 = arith.constant 0 : index
    %c0_32 = arith.constant 0 : index
    %c0_33 = arith.constant 0 : index
    %72 = vector.load %arg2[%c0_31, %c0_32, %c0_33] : memref<2x8x4xi32, #tpu.memory_space<vmem>>, vector<2x8x4xi32>
    %73 = vector.shape_cast %72 : vector<2x8x4xi32> to vector<16x4xi32>
    %74 = vector.extract_strided_slice %73 {offsets = [0, 2], sizes = [16, 1], strides = [1, 1]} : vector<16x4xi32> to vector<16x1xi32>
    %75 = vector.extract_strided_slice %73 {offsets = [0, 3], sizes = [16, 1], strides = [1, 1]} : vector<16x4xi32> to vector<16x1xi32>
    %76 = tpu.bitcast %75 : vector<16x1xi32> -> vector<16x1xf32>
    %cst_34 = arith.constant dense<0xFF800000> : vector<16xf32>
    %77 = vector.multi_reduction <maximumf>, %69, %cst_34 [1] : vector<16x9xf32> to vector<16xf32>
    %78 = vector.shape_cast %77 : vector<16xf32> to vector<16x1xf32>
    %79 = vector.broadcast %78 : vector<16x1xf32> to vector<16x9xf32>
    %80 = arith.cmpf oeq, %69, %79 : vector<16x9xf32>
    %c9_i32 = arith.constant 9 : i32
    %81 = vector.broadcast %c9_i32 : i32 to vector<16x9xi32>
    %82 = arith.select %80, %1, %81 : vector<16x9xi1>, vector<16x9xi32>
    %cst_35 = arith.constant dense<2147483647> : vector<16xi32>
    %83 = vector.multi_reduction <minsi>, %82, %cst_35 [1] : vector<16x9xi32> to vector<16xi32>
    %84 = vector.shape_cast %83 : vector<16xi32> to vector<16x1xi32>
    %85 = vector.broadcast %78 : vector<16x1xf32> to vector<16x9xf32>
    %86 = arith.subf %69, %85 : vector<16x9xf32>
    %87 = math.exp %86 : vector<16x9xf32>
    %cst_36 = arith.constant dense<0.000000e+00> : vector<16xf32>
    %88 = vector.multi_reduction <add>, %87, %cst_36 [1] : vector<16x9xf32> to vector<16xf32>
    %89 = vector.shape_cast %88 : vector<16xf32> to vector<16x1xf32>
    %90 = math.log %89 : vector<16x1xf32>
    %91 = arith.addf %78, %90 : vector<16x1xf32>
    %c0_i32 = arith.constant 0 : i32
    %92 = vector.broadcast %c0_i32 : i32 to vector<16x1xi32>
    %93 = arith.cmpi slt, %74, %92 : vector<16x1xi32>
    %c0_i32_37 = arith.constant 0 : i32
    %94 = vector.broadcast %c0_i32_37 : i32 to vector<16x1xi32>
    %95 = arith.maxsi %74, %94 : vector<16x1xi32>
    %96 = vector.broadcast %95 : vector<16x1xi32> to vector<16x9xi32>
    %97 = arith.cmpi eq, %1, %96 : vector<16x9xi32>
    %98 = arith.extui %97 : vector<16x9xi1> to vector<16x9xi32>
    %99 = arith.sitofp %98 : vector<16x9xi32> to vector<16x9xf32>
    %100 = vector.broadcast %91 : vector<16x1xf32> to vector<16x9xf32>
    %101 = arith.subf %69, %100 : vector<16x9xf32>
    %102 = arith.mulf %101, %99 : vector<16x9xf32>
    %cst_38 = arith.constant dense<0.000000e+00> : vector<16xf32>
    %103 = vector.multi_reduction <add>, %102, %cst_38 [1] : vector<16x9xf32> to vector<16xf32>
    %104 = vector.shape_cast %103 : vector<16xf32> to vector<16x1xf32>
    %cst_39 = arith.constant 0.000000e+00 : f32
    %105 = vector.broadcast %cst_39 : f32 to vector<16x1xf32>
    %106 = arith.subf %105, %104 : vector<16x1xf32>
    %107 = arith.mulf %106, %76 : vector<16x1xf32>
    %cst_40 = arith.constant 0.000000e+00 : f32
    %108 = vector.broadcast %cst_40 : f32 to vector<16x1xf32>
    %109 = arith.select %93, %108, %107 : vector<16x1xi1>, vector<16x1xf32>
    %c0_i32_41 = arith.constant 0 : i32
    %110 = vector.broadcast %c0_i32_41 : i32 to vector<16x2xi32>
    %111 = arith.cmpi eq, %2, %110 : vector<16x2xi32>
    %112 = arith.sitofp %84 : vector<16x1xi32> to vector<16x1xf32>
    %113 = vector.shape_cast %112 : vector<16x1xf32> to vector<16x1xf32>
    %114 = vector.broadcast %113 : vector<16x1xf32> to vector<16x2xf32>
    %115 = vector.shape_cast %109 : vector<16x1xf32> to vector<16x1xf32>
    %116 = vector.broadcast %115 : vector<16x1xf32> to vector<16x2xf32>
    %117 = arith.select %111, %114, %116 : vector<16x2xi1>, vector<16x2xf32>
    %118 = vector.extract_strided_slice %117 {offsets = [0, 0], sizes = [8, 2], strides = [1, 1]} : vector<16x2xf32> to vector<8x2xf32>
    %cst_42 = arith.constant dense<0.000000e+00> : vector<2x8xf32>
    %119 = tpu.matmul %7, %118, %cst_42 {dimension_numbers = #tpu.dot_dimension_numbers<[1], [1], [0], [0], [0, 0, 1, 0], [], []>} : vector<2x2xf32>, vector<8x2xf32>, vector<2x8xf32> -> vector<2x8xf32>
    %c0_43 = arith.constant 0 : index
    %c0_44 = arith.constant 0 : index
    %c0_45 = arith.constant 0 : index
    %120 = vector.load %arg7[%c0_43, %c0_44, %c0_45] : memref<2x2x8xf32, #tpu.memory_space<vmem>>, vector<1x2x8xf32>
    %121 = vector.shape_cast %120 : vector<1x2x8xf32> to vector<2x8xf32>
    %122 = vector.shape_cast %119 : vector<2x8xf32> to vector<1x2x8xf32>
    tpu.vector_store %arg7[%c0_43, %c0_44, %c0_45], %122 {strides = array<i32>} : memref<2x2x8xf32, #tpu.memory_space<vmem>>, vector<1x2x8xf32>,
    %123 = vector.extract_strided_slice %117 {offsets = [8, 0], sizes = [8, 2], strides = [1, 1]} : vector<16x2xf32> to vector<8x2xf32>
    %cst_46 = arith.constant dense<0.000000e+00> : vector<2x8xf32>
    %124 = tpu.matmul %7, %123, %cst_46 {dimension_numbers = #tpu.dot_dimension_numbers<[1], [1], [0], [0], [0, 0, 1, 0], [], []>} : vector<2x2xf32>, vector<8x2xf32>, vector<2x8xf32> -> vector<2x8xf32>
    %c1_47 = arith.constant 1 : index
    %c0_48 = arith.constant 0 : index
    %c0_49 = arith.constant 0 : index
    %125 = vector.load %arg7[%c1_47, %c0_48, %c0_49] : memref<2x2x8xf32, #tpu.memory_space<vmem>>, vector<1x2x8xf32>
    %126 = vector.shape_cast %125 : vector<1x2x8xf32> to vector<2x8xf32>
    %127 = vector.shape_cast %124 : vector<2x8xf32> to vector<1x2x8xf32>
    tpu.vector_store %arg7[%c1_47, %c0_48, %c0_49], %127 {strides = array<i32>} : memref<2x2x8xf32, #tpu.memory_space<vmem>>, vector<1x2x8xf32>,
    return
  }
  func.func @transform_0(%arg0: i32) -> (i32, i32, i32) {
    %c0_i32 = arith.constant 0 : i32
    %c0_i32_0 = arith.constant 0 : i32
    %c0_i32_1 = arith.constant 0 : i32
    return %arg0, %c0_i32, %c0_i32_0 : i32, i32, i32
  }
  func.func @transform_1(%arg0: i32) -> (i32, i32, i32) {
    %c0_i32 = arith.constant 0 : i32
    %c0_i32_0 = arith.constant 0 : i32
    %c0_i32_1 = arith.constant 0 : i32
    return %arg0, %c0_i32, %c0_i32_0 : i32, i32, i32
  }
  func.func @transform_2(%arg0: i32) -> (i32, i32) {
    %c0_i32 = arith.constant 0 : i32
    %c0_i32_0 = arith.constant 0 : i32
    %c0_i32_1 = arith.constant 0 : i32
    return %c0_i32, %c0_i32_0 : i32, i32
  }
  func.func @transform_3(%arg0: i32) -> (i32, i32) {
    %c0_i32 = arith.constant 0 : i32
    %c0_i32_0 = arith.constant 0 : i32
    %c0_i32_1 = arith.constant 0 : i32
    return %c0_i32, %c0_i32_0 : i32, i32
  }
  func.func @transform_4(%arg0: i32) -> (i32, i32, i32) {
    %c0_i32 = arith.constant 0 : i32
    %c0_i32_0 = arith.constant 0 : i32
    %c0_i32_1 = arith.constant 0 : i32
    return %arg0, %c0_i32, %c0_i32_0 : i32, i32, i32
  }
  func.func @transform_5(%arg0: i32) -> (i32, i32, i32) {
    %c0_i32 = arith.constant 0 : i32
    %c0_i32_0 = arith.constant 0 : i32
    %c0_i32_1 = arith.constant 0 : i32
    return %arg0, %c0_i32, %c0_i32_0 : i32, i32, i32
  }
  func.func @transform_6(%arg0: i32) -> (i32, i32, i32) {
    %c0_i32 = arith.constant 0 : i32
    %c0_i32_0 = arith.constant 0 : i32
    %c0_i32_1 = arith.constant 0 : i32
    return %arg0, %c0_i32, %c0_i32_0 : i32, i32, i32
  }
}

</mosaic_0001>

<llo_original>
// kernel: tpu_custom_call.1
$region0: #{tpu_custom_call.1}
  #allocation0 [shape = 'u32[]', space=smem, size = 0x4, offset = 0x4, fixed_abs, tag = 'smem constant byte address 0x4 - core index']
  #allocation1 [shape = 'u32[144,128]{1,0:T(1,128)}', space=vmem, size = 0x12000, scoped, tag = 'internal scratch']
  %s0 = inlined_call_operand.vmem [shape: bf16[2,16,32], index: 0, kind: input, shape index: {}]
  %s1 = inlined_call_operand.vmem [shape: s32[2,8,4], index: 1, kind: input, shape index: {}]
  %s2 = inlined_call_operand.vmem [shape: f32[32,9], index: 2, kind: input, shape index: {}]
  %s3 = inlined_call_operand.vmem [shape: f32[1,9], index: 3, kind: input, shape index: {}]
  %s4 = inlined_call_operand.hbm [shape: bf16[2,8,32], index: 4, kind: output, shape index: {0}]
  %s5 = inlined_call_operand.hbm [shape: f32[2,8,9], index: 5, kind: output, shape index: {1}]
  %s6 = inlined_call_operand.hbm [shape: f32[2,2,8], index: 6, kind: output, shape index: {2}]
  %7 = xla_tuple %s4, %s5, %s6
  %s8 = sld [smem:[#allocation0]]
  $region42: #{tpu_custom_call.1} parent=0
    _
  %s10 = ssub.s32 1, %s8
  %s11 = scalar_select 0, %s10, %s8
  $region1: #{tpu_custom_call.1} parent=0
    #allocation2 [shape = 'u8[4096]{0}', space=vmem, size = 0x1000, scoped, tag = 'output window, operand 0, single buffered']
    #allocation3 [shape = 's32[1]{0}', space=sflag, size = 0x4, scoped, tag = 'scoped memory for tpu_custom_call.1']
    #allocation4 [shape = 'u8[8192]{0}', space=vmem, size = 0x2000, scoped, tag = 'output window, operand 1, single buffered']
    #allocation5 [shape = 's32[1]{0}', space=sflag, size = 0x4, scoped, tag = 'scoped memory for tpu_custom_call.1']
    #allocation6 [shape = 'u8[2048]{0}', space=vmem, size = 0x800, scoped, tag = 'output window, operand 2, single buffered']
    %12 = vsyncpa [#allocation3], 0
    %13 = vsyncpa [#allocation5], 0
    // Predicated region
    $region2: #{tpu_custom_call.1} parent=1 // pred_check
      _
    $region3: #{tpu_custom_call.1} parent=1 // pred_check_branch
      %15 = sbr.rel (0) target = $region5
    $region4: #{tpu_custom_call.1} parent=1 // pred_region
      _
    $region5: #{tpu_custom_call.1} parent=1 // pred_fallthru
      _
    // Predicated region
    $region6: #{tpu_custom_call.1} parent=1 // pred_check
      _
    $region7: #{tpu_custom_call.1} parent=1 // pred_check_branch
      %17 = sbr.rel (0) target = $region9
    $region8: #{tpu_custom_call.1} parent=1 // pred_region
      _
    $region9: #{tpu_custom_call.1} parent=1 // pred_fallthru
      _
    // Predicated region
    $region10: #{tpu_custom_call.1} parent=1 // pred_check
      _
    $region11: #{tpu_custom_call.1} parent=1 // pred_check_branch
      %19 = sbr.rel (0) target = $region13
    $region12: #{tpu_custom_call.1} parent=1 // pred_region
      _
    $region13: #{tpu_custom_call.1} parent=1 // pred_fallthru
      _
    // Predicated region
    $region14: #{tpu_custom_call.1} parent=1 // pred_check
      _
    $region15: #{tpu_custom_call.1} parent=1 // pred_check_branch
      %21 = sbr.rel (0) target = $region17
    $region16: #{tpu_custom_call.1} parent=1 // pred_region
      _
    $region17: #{tpu_custom_call.1} parent=1 // pred_fallthru
      _
    %v23 = vlaneseq
    %v24 = vand.u32 %v23, 127
    %v25 = vlaneseq
    %v26 = vshrl.u32 %v25, 7
    %vm27 = vcmp.eq.s32.totalorder %v26, %v24
    %v28 = vsel %vm27, 1, 0
    %v29 = vcvt.s32.f32 %v28
    %v30 = vld [vmem:[%s1] sm:$0xff]
    %31 = vset.pattern.permute.xlu0 0
    %32 = vperm.xlu0 %31, %v30
    %v33 = vpop.permute.xlu0 %32
    %vm34 = vcmp.ge.s32.totalorder %v24, %v33
    %35 = vset.pattern.permute.xlu0 1
    %36 = vperm.xlu0 %35, %v30
    %v37 = vpop.permute.xlu0 %36
    %vm38 = vcmp.le.s32.totalorder %v24, %v37
    %vm39 = vmand %vm34, %vm38
    %v40 = vsel %vm39, 1, 0
    %v41 = vcvt.s32.f32 %v40
    %v42 = vpack.c.bf16 %v41, %v41
    %43 = vrot.lane.b32.xlu0 %v30, 1
    %v44 = vpop.permute.xlu0 %43
    %v45 = vsub.s32 %v30, %v44
    %v46 = vadd.s32 %v45, 1
    %v47 = vcvt.s32.f32 %v46
    %v48 = vrcp.pop %v47
    %v49 = vmul.f32 1.0, %v48
    %v50 = vld [vmem:[%s0] sm:$0xf]
    %v51 = vld [vmem:[%s0 + $0x4] sm:$0xf]
    %v54 = vunpack.c.l.b16 %v50
    %v55 = vunpack.c.l.b16 %v51
    %v56 = vpack.c.b16 %v55, %v54
    %vm58 = vcmask 130048
    %v60 = vsel %vm58, %v42, 0
    %62 = vmatprep.subr.bf16.mxu0 0
    %63 = vmatpush1.bf16.msra.mxu0 0
    %64 = vmatprep.subr.bf16.mxu0 0
    %65 = vmatpush1.bf16.msra.mxu0 0
    %66 = vmatprep.subr.bf16.mxu0 0
    %67 = vmatpush1.bf16.msra.mxu0 0
    %68 = vmatprep.subr.bf16.mxu0 0
    %69 = vmatpush1.bf16.msra.mxu0 0
    %70 = vmatprep.subr.bf16.mxu0 0
    %71 = vmatpush1.bf16.msra.mxu0 0
    %72 = vmatprep.subr.bf16.mxu0 0
    %73 = vmatpush1.bf16.msra.mxu0 0
    %74 = vmatprep.subr.bf16.mxu0 0
    %75 = vmatpush1.bf16.msra.mxu0 0
    %76 = vmatprep.subr.bf16.mxu0 0
    %77 = vmatpush1.bf16.msra.mxu0 %v56
    %78 = vmatprep.subr.bf16.mxu0 0
    %79 = vmatpush2.bf16.msra.mxu0 0
    %80 = vmatprep.subr.bf16.mxu0 0
    %81 = vmatpush2.bf16.msra.mxu0 0
    %82 = vmatprep.subr.bf16.mxu0 0
    %83 = vmatpush2.bf16.msra.mxu0 0
    %84 = vmatprep.subr.bf16.mxu0 0
    %85 = vmatpush2.bf16.msra.mxu0 0
    %86 = vmatprep.subr.bf16.mxu0 0
    %87 = vmatpush2.bf16.msra.mxu0 0
    %88 = vmatprep.subr.bf16.mxu0 0
    %89 = vmatpush2.bf16.msra.mxu0 0
    %90 = vmatprep.subr.bf16.mxu0 0
    %91 = vmatpush2.bf16.msra.mxu0 0
    %92 = vmatprep.subr.bf16.mxu0 0
    %93 = vmatpush2.bf16.msra.mxu0 0
    %94 = vmatprep.mubr.bf16.mxu0 0
    %95 = vmatmul.mubr.bf16.gmra.mxu0 %v60
    %v96 = vpop.f32.mrf.mxu0
    %v97 = vadd.f32 0.0, %v96
    %v98 = vpop.f32.mrf.mxu0
    %v99 = vpop.f32.mrf.mxu0
    %v100 = vpop.f32.mrf.mxu0
    %101 = vdwg.mxu0
    %103 = vset.pattern.permute.xlu0 1
    %104 = vperm.xlu0 %103, %v49
    %v105 = vpop.permute.xlu0 %104
    %v107 = vmul.f32 %v97, %v105
    %v108 = vpack.c.bf16 %v107, %v107
    %vm109 = vcmask 257024
    %110 = vst.msk [vmem:[#allocation2] sm:$0xf] %vm109, %v108
    %s111 = scalar_lea.vmem %s1, 8
    %v112 = vld [vmem:[%s111] sm:$0xff]
    %113 = vset.pattern.permute.xlu0 0
    %114 = vperm.xlu0 %113, %v112
    %v115 = vpop.permute.xlu0 %114
    %vm116 = vcmp.ge.s32.totalorder %v24, %v115
    %117 = vset.pattern.permute.xlu0 1
    %118 = vperm.xlu0 %117, %v112
    %v119 = vpop.permute.xlu0 %118
    %vm120 = vcmp.le.s32.totalorder %v24, %v119
    %vm121 = vmand %vm116, %vm120
    %v122 = vsel %vm121, 1, 0
    %v123 = vcvt.s32.f32 %v122
    %v124 = vpack.c.bf16 %v123, %v123
    %125 = vrot.lane.b32.xlu0 %v112, 1
    %v126 = vpop.permute.xlu0 %125
    %v127 = vsub.s32 %v112, %v126
    %v128 = vadd.s32 %v127, 1
    %v129 = vcvt.s32.f32 %v128
    %v130 = vrcp.pop %v129
    %v131 = vmul.f32 1.0, %v130
    %s132 = scalar_lea.vmem %s0, 8
    %v133 = vld [vmem:[%s132] sm:$0xf]
    %v134 = vld [vmem:[%s132 + $0x4] sm:$0xf]
    %v137 = vunpack.c.l.b16 %v133
    %v138 = vunpack.c.l.b16 %v134
    %v139 = vpack.c.b16 %v138, %v137
    %v142 = vsel %vm58, %v124, 0
    %144 = vmatprep.subr.bf16.mxu0 0
    %145 = vmatpush1.bf16.msra.mxu0 0
    %146 = vmatprep.subr.bf16.mxu0 0
    %147 = vmatpush1.bf16.msra.mxu0 0
    %148 = vmatprep.subr.bf16.mxu0 0
    %149 = vmatpush1.bf16.msra.mxu0 0
    %150 = vmatprep.subr.bf16.mxu0 0
    %151 = vmatpush1.bf16.msra.mxu0 0
    %152 = vmatprep.subr.bf16.mxu0 0
    %153 = vmatpush1.bf16.msra.mxu0 0
    %154 = vmatprep.subr.bf16.mxu0 0
    %155 = vmatpush1.bf16.msra.mxu0 0
    %156 = vmatprep.subr.bf16.mxu0 0
    %157 = vmatpush1.bf16.msra.mxu0 0
    %158 = vmatprep.subr.bf16.mxu0 0
    %159 = vmatpush1.bf16.msra.mxu0 %v139
    %160 = vmatprep.subr.bf16.mxu0 0
    %161 = vmatpush2.bf16.msra.mxu0 0
    %162 = vmatprep.subr.bf16.mxu0 0
    %163 = vmatpush2.bf16.msra.mxu0 0
    %164 = vmatprep.subr.bf16.mxu0 0
    %165 = vmatpush2.bf16.msra.mxu0 0
    %166 = vmatprep.subr.bf16.mxu0 0
    %167 = vmatpush2.bf16.msra.mxu0 0
    %168 = vmatprep.subr.bf16.mxu0 0
    %169 = vmatpush2.bf16.msra.mxu0 0
    %170 = vmatprep.subr.bf16.mxu0 0
    %171 = vmatpush2.bf16.msra.mxu0 0
    %172 = vmatprep.subr.bf16.mxu0 0
    %173 = vmatpush2.bf16.msra.mxu0 0
    %174 = vmatprep.subr.bf16.mxu0 0
    %175 = vmatpush2.bf16.msra.mxu0 0
    %176 = vmatprep.mubr.bf16.mxu0 0
    %177 = vmatmul.mubr.bf16.gmra.mxu0 %v142
    %v178 = vpop.f32.mrf.mxu0
    %v179 = vadd.f32 0.0, %v178
    %v180 = vpop.f32.mrf.mxu0
    %v181 = vpop.f32.mrf.mxu0
    %v182 = vpop.f32.mrf.mxu0
    %183 = vdwg.mxu0
    %185 = vset.pattern.permute.xlu0 1
    %186 = vperm.xlu0 %185, %v131
    %v187 = vpop.permute.xlu0 %186
    %v189 = vmul.f32 %v179, %v187
    %v190 = vpack.c.bf16 %v189, %v189
    %s191 = scalar_lea.vmem [#allocation2], 4
    %192 = vst.msk [vmem:[%s191] sm:$0xf] %vm109, %v190
    %v193 = vld [vmem:[#allocation2] sm:$0xf]
    %v194 = vld [vmem:[#allocation2 + $0x4] sm:$0xf]
    %v195 = vunpack.c.l.bf16 %v193
    %v196 = vunpack.c.l.bf16 %v194
    %v197 = vld [vmem:[%s2] sm:$0xff]
    %v198 = vld [vmem:[%s2 + $0x8] sm:$0xff]
    %v199 = vld [vmem:[%s2 + $0x10] sm:$0xff]
    %v200 = vld [vmem:[%s2 + $0x18] sm:$0xff]
    %v201 = vld [vmem:[%s3] sm:$0x1]
    %v203 = vlaneseq
    %v204 = vshrl.u32 %v203, 7
    %v205 = vsub.s32 0, %v204
    %v206 = vrot.slane %v201, %v205
    %vm208 = vcmask 261120
    %v210 = vsel %vm208, %v195, 0
    %v213 = vsel %vm208, %v196, 0
    %215 = vmatprep.subr.mxu0 0.0
    %216 = vmatpush1.msra.mxu0 0.0
    %217 = vmatprep.subr.mxu0 0.0
    %218 = vmatpush1.msra.mxu0 0.0
    %219 = vmatprep.subr.mxu0 0.0
    %220 = vmatpush1.msra.mxu0 0.0
    %221 = vmatprep.subr.mxu0 0.0
    %222 = vmatpush1.msra.mxu0 0.0
    %223 = vmatprep.subr.mxu0 0.0
    %224 = vmatpush1.msra.mxu0 0.0
    %225 = vmatprep.subr.mxu0 0.0
    %226 = vmatpush1.msra.mxu0 0.0
    %227 = vmatprep.subr.mxu0 0.0
    %228 = vmatpush1.msra.mxu0 0.0
    %229 = vmatprep.subr.mxu0 0.0
    %230 = vmatpush1.msra.mxu0 0.0
    %231 = vmatprep.subr.mxu0 0.0
    %232 = vmatpush1.msra.mxu0 0.0
    %233 = vmatprep.subr.mxu0 0.0
    %234 = vmatpush1.msra.mxu0 0.0
    %235 = vmatprep.subr.mxu0 0.0
    %236 = vmatpush1.msra.mxu0 0.0
    %237 = vmatprep.subr.mxu0 0.0
    %238 = vmatpush1.msra.mxu0 0.0
    %239 = vmatprep.subr.mxu0 0.0
    %240 = vmatpush1.msra.mxu0 %v200
    %241 = vmatprep.subr.mxu0 0.0
    %242 = vmatpush1.msra.mxu0 %v199
    %243 = vmatprep.subr.mxu0 0.0
    %244 = vmatpush1.msra.mxu0 %v198
    %245 = vmatprep.subr.mxu0 0.0
    %246 = vmatpush1.msra.mxu0 %v197
    %247 = vmatprep.subr.mxu0 0.0
    %248 = vmatpush2.msra.mxu0 0.0
    %249 = vmatprep.subr.mxu0 0.0
    %250 = vmatpush2.msra.mxu0 0.0
    %251 = vmatprep.subr.mxu0 0.0
    %252 = vmatpush2.msra.mxu0 0.0
    %253 = vmatprep.subr.mxu0 0.0
    %254 = vmatpush2.msra.mxu0 0.0
    %255 = vmatprep.subr.mxu0 0.0
    %256 = vmatpush2.msra.mxu0 0.0
    %257 = vmatprep.subr.mxu0 0.0
    %258 = vmatpush2.msra.mxu0 0.0
    %259 = vmatprep.subr.mxu0 0.0
    %260 = vmatpush2.msra.mxu0 0.0
    %261 = vmatprep.subr.mxu0 0.0
    %262 = vmatpush2.msra.mxu0 0.0
    %263 = vmatprep.subr.mxu0 0.0
    %264 = vmatpush2.msra.mxu0 0.0
    %265 = vmatprep.subr.mxu0 0.0
    %266 = vmatpush2.msra.mxu0 0.0
    %267 = vmatprep.subr.mxu0 0.0
    %268 = vmatpush2.msra.mxu0 0.0
    %269 = vmatprep.subr.mxu0 0.0
    %270 = vmatpush2.msra.mxu0 0.0
    %271 = vmatprep.subr.mxu0 0.0
    %272 = vmatpush2.msra.mxu0 0.0
    %273 = vmatprep.subr.mxu0 0.0
    %274 = vmatpush2.msra.mxu0 0.0
    %275 = vmatprep.subr.mxu0 0.0
    %276 = vmatpush2.msra.mxu0 0.0
    %277 = vmatprep.subr.mxu0 0.0
    %278 = vmatpush2.msra.mxu0 0.0
    %279 = vmatprep.mubr.f32.mxu0 0.0
    %280 = vmatmul.mubr.f32.gmra.mxu0 %v210
    %v281 = vpop.f32.mrf.mxu0
    %v282 = vadd.f32 %v206, %v281
    %v283 = vpop.f32.mrf.mxu0
    %284 = vmatprep.mubr.f32.mxu0 0.0
    %285 = vmatmul.mubr.f32.gmra.mxu0 %v213
    %v286 = vpop.f32.mrf.mxu0
    %v287 = vadd.f32 %v206, %v286
    %v288 = vpop.f32.mrf.mxu0
    %289 = vdwg.mxu0
    %vm290 = vcmask 72704
    %291 = vst.msk [vmem:[#allocation4] sm:$0xff] %vm290, %v282
    %292 = vst.msk [vmem:[#allocation4 + $0x8] sm:$0xff] %vm290, %v287
    %v293 = vld [vmem:[%s1] sm:$0xff]
    %v294 = vld [vmem:[%s1 + $0x8] sm:$0xff]
    %v297 = vsel %vm290, %v282, -inf
    %298 = vmax.xlane.f32.xlu0 %v297
    %v299 = vpop.xlane.xlu0 %298
    %v300 = vsel %vm290, %v287, -inf
    %301 = vmax.xlane.f32.xlu0 %v300
    %v302 = vpop.xlane.xlu0 %301
    %vm303 = vcmp.eq.f32.partialorder %v282, %v299
    %vm304 = vcmp.eq.f32.partialorder %v287, %v302
    %v305 = vsel %vm303, %v24, 9
    %v306 = vsel %vm304, %v24, 9
    %v307 = vsel %vm290, %v305, 2147483647
    %v308 = vand.u32 %v307, 65535
    %v309 = vshra.s32 %v307, 16
    %v310 = vcvt.s32.f32 %v308
    %v311 = vcvt.s32.f32 %v309
    %312 = vmin.xlane.f32.xlu0 %v311
    %v313 = vpop.xlane.xlu0 %312
    %vm314 = vcmp.eq.f32.partialorder %v311, %v313
    %v315 = vsel %vm314, %v310, inf
    %316 = vmin.xlane.f32.xlu0 %v315
    %v317 = vpop.xlane.xlu0 %316
    %v318 = vcvt.f32.s32 %v317
    %v319 = vcvt.f32.s32 %v313
    %v320 = vshll.u32 %v319, 16
    %v321 = vadd.s32 %v320, %v318
    %v322 = vsel %vm290, %v306, 2147483647
    %v323 = vand.u32 %v322, 65535
    %v324 = vshra.s32 %v322, 16
    %v325 = vcvt.s32.f32 %v323
    %v326 = vcvt.s32.f32 %v324
    %327 = vmin.xlane.f32.xlu0 %v326
    %v328 = vpop.xlane.xlu0 %327
    %vm329 = vcmp.eq.f32.partialorder %v326, %v328
    %v330 = vsel %vm329, %v325, inf
    %331 = vmin.xlane.f32.xlu0 %v330
    %v332 = vpop.xlane.xlu0 %331
    %v333 = vcvt.f32.s32 %v332
    %v334 = vcvt.f32.s32 %v328
    %v335 = vshll.u32 %v334, 16
    %v336 = vadd.s32 %v335, %v333
    %v337 = vsub.f32 %v282, %v299
    %v338 = vsub.f32 %v287, %v302
    %v339 = vmul.f32 %v337, 1.442695
    %v340 = vpow.pop %v339
    %v341 = vmul.f32 %v338, 1.442695
    %v342 = vpow.pop %v341
    %v343 = vsel %vm290, %v340, 0.0
    %344 = vadd.xlane.f32.xlu0 %v343
    %v345 = vpop.xlane.xlu0 %344
    %v346 = vsel %vm290, %v342, 0.0
    %347 = vadd.xlane.f32.xlu0 %v346
    %v348 = vpop.xlane.xlu0 %347
    %v349 = vlog2.pop %v345
    %v350 = vmul.f32 %v349, 0.6931472
    %v351 = vlog2.pop %v348
    %v352 = vmul.f32 %v351, 0.6931472
    %v353 = vadd.f32 %v299, %v350
    %v354 = vadd.f32 %v302, %v352
    %vm355 = vcmp.lt.s32.totalorder %v293, 0
    %vm356 = vcmp.lt.s32.totalorder %v294, 0
    %vm357 = vcmp.gt.s32.totalorder %v293, 0
    %v358 = vsel %vm357, %v293, 0
    %vm359 = vcmp.gt.s32.totalorder %v294, 0
    %v360 = vsel %vm359, %v294, 0
    %361 = vset.pattern.permute.xlu0 2
    %362 = vperm.xlu0 %361, %v358
    %v363 = vpop.permute.xlu0 %362
    %364 = vset.pattern.permute.xlu0 2
    %365 = vperm.xlu0 %364, %v360
    %v366 = vpop.permute.xlu0 %365
    %vm367 = vcmp.eq.s32.totalorder %v24, %v363
    %vm368 = vcmp.eq.s32.totalorder %v24, %v366
    %v369 = vsel %vm367, 1, 0
    %v370 = vsel %vm368, 1, 0
    %v371 = vcvt.s32.f32 %v369
    %v372 = vcvt.s32.f32 %v370
    %v373 = vsub.f32 %v282, %v353
    %v374 = vsub.f32 %v287, %v354
    %v375 = vmul.f32 %v373, %v371
    %v376 = vmul.f32 %v374, %v372
    %v377 = vsel %vm290, %v375, 0.0
    %378 = vadd.xlane.f32.xlu0 %v377
    %v379 = vpop.xlane.xlu0 %378
    %v380 = vsel %vm290, %v376, 0.0
    %381 = vadd.xlane.f32.xlu0 %v380
    %v382 = vpop.xlane.xlu0 %381
    %v383 = vsub.f32 0.0, %v379
    %v384 = vsub.f32 0.0, %v382
    %v385 = vmul.f32 %v383, %v293
    %v386 = vmul.f32 %v384, %v294
    %389 = vrot.lane.b32.xlu0 %v385, 127
    %v390 = vpop.permute.xlu0 %389
    %391 = vrot.lane.b32.xlu0 %v386, 127
    %v392 = vpop.permute.xlu0 %391
    %v395 = vsel %vm355, 0.0, %v390
    %v396 = vsel %vm356, 0.0, %v392
    %vm397 = vcmp.eq.s32.totalorder %v24, 0
    %v398 = vcvt.s32.f32 %v321
    %v399 = vcvt.s32.f32 %v336
    %401 = vset.pattern.permute.xlu0 2
    %402 = vperm.xlu0 %401, %v395
    %v403 = vpop.permute.xlu0 %402
    %406 = vset.pattern.permute.xlu0 2
    %407 = vperm.xlu0 %406, %v396
    %v408 = vpop.permute.xlu0 %407
    %v410 = vsel %vm397, %v398, %v403
    %v411 = vsel %vm397, %v399, %v408
    %vm412 = vcmask 15360
    %v414 = vsel %vm412, %v29, 0
    %v417 = vsel %vm412, %v410, 0
    %419 = vmatprep.subr.mxu0 0.0
    %420 = vmatpush1.xpose.msra.mxu0 0.0
    %421 = vmatprep.subr.mxu0 0.0
    %422 = vmatpush1.xpose.msra.mxu0 0.0
    %423 = vmatprep.subr.mxu0 0.0
    %424 = vmatpush1.xpose.msra.mxu0 0.0
    %425 = vmatprep.subr.mxu0 0.0
    %426 = vmatpush1.xpose.msra.mxu0 0.0
    %427 = vmatprep.subr.mxu0 0.0
    %428 = vmatpush1.xpose.msra.mxu0 0.0
    %429 = vmatprep.subr.mxu0 0.0
    %430 = vmatpush1.xpose.msra.mxu0 0.0
    %431 = vmatprep.subr.mxu0 0.0
    %432 = vmatpush1.xpose.msra.mxu0 0.0
    %433 = vmatprep.subr.mxu0 0.0
    %434 = vmatpush1.xpose.msra.mxu0 0.0
    %435 = vmatprep.subr.mxu0 0.0
    %436 = vmatpush1.xpose.msra.mxu0 0.0
    %437 = vmatprep.subr.mxu0 0.0
    %438 = vmatpush1.xpose.msra.mxu0 0.0
    %439 = vmatprep.subr.mxu0 0.0
    %440 = vmatpush1.xpose.msra.mxu0 0.0
    %441 = vmatprep.subr.mxu0 0.0
    %442 = vmatpush1.xpose.msra.mxu0 0.0
    %443 = vmatprep.subr.mxu0 0.0
    %444 = vmatpush1.xpose.msra.mxu0 0.0
    %445 = vmatprep.subr.mxu0 0.0
    %446 = vmatpush1.xpose.msra.mxu0 0.0
    %447 = vmatprep.subr.mxu0 0.0
    %448 = vmatpush1.xpose.msra.mxu0 0.0
    %449 = vmatprep.subr.mxu0 0.0
    %450 = vmatpush1.xpose.msra.mxu0 %v417
    %451 = vmatprep.subr.mxu0 0.0
    %452 = vmatpush2.xpose.msra.mxu0 0.0
    %453 = vmatprep.subr.mxu0 0.0
    %454 = vmatpush2.xpose.msra.mxu0 0.0
    %455 = vmatprep.subr.mxu0 0.0
    %456 = vmatpush2.xpose.msra.mxu0 0.0
    %457 = vmatprep.subr.mxu0 0.0
    %458 = vmatpush2.xpose.msra.mxu0 0.0
    %459 = vmatprep.subr.mxu0 0.0
    %460 = vmatpush2.xpose.msra.mxu0 0.0
    %461 = vmatprep.subr.mxu0 0.0
    %462 = vmatpush2.xpose.msra.mxu0 0.0
    %463 = vmatprep.subr.mxu0 0.0
    %464 = vmatpush2.xpose.msra.mxu0 0.0
    %465 = vmatprep.subr.mxu0 0.0
    %466 = vmatpush2.xpose.msra.mxu0 0.0
    %467 = vmatprep.subr.mxu0 0.0
    %468 = vmatpush2.xpose.msra.mxu0 0.0
    %469 = vmatprep.subr.mxu0 0.0
    %470 = vmatpush2.xpose.msra.mxu0 0.0
    %471 = vmatprep.subr.mxu0 0.0
    %472 = vmatpush2.xpose.msra.mxu0 0.0
    %473 = vmatprep.subr.mxu0 0.0
    %474 = vmatpush2.xpose.msra.mxu0 0.0
    %475 = vmatprep.subr.mxu0 0.0
    %476 = vmatpush2.xpose.msra.mxu0 0.0
    %477 = vmatprep.subr.mxu0 0.0
    %478 = vmatpush2.xpose.msra.mxu0 0.0
    %479 = vmatprep.subr.mxu0 0.0
    %480 = vmatpush2.xpose.msra.mxu0 0.0
    %481 = vmatprep.subr.mxu0 0.0
    %482 = vmatpush2.xpose.msra.mxu0 0.0
    %483 = vmatprep.mubr.f32.mxu0 0.0
    %484 = vmatmul.mubr.f32.gmra.mxu0 %v414
    %v485 = vpop.f32.mrf.mxu0
    %v486 = vadd.f32 0.0, %v485
    %v487 = vpop.f32.mrf.mxu0
    %488 = vdwg.mxu0
    %vm489 = vcmask 58368
    %490 = vst.msk [vmem:[#allocation6] sm:$0x3] %vm489, %v486
    %v492 = vsel %vm412, %v411, 0
    %494 = vmatprep.subr.mxu0 0.0
    %495 = vmatpush1.xpose.msra.mxu0 0.0
    %496 = vmatprep.subr.mxu0 0.0
    %497 = vmatpush1.xpose.msra.mxu0 0.0
    %498 = vmatprep.subr.mxu0 0.0
    %499 = vmatpush1.xpose.msra.mxu0 0.0
    %500 = vmatprep.subr.mxu0 0.0
    %501 = vmatpush1.xpose.msra.mxu0 0.0
    %502 = vmatprep.subr.mxu0 0.0
    %503 = vmatpush1.xpose.msra.mxu0 0.0
    %504 = vmatprep.subr.mxu0 0.0
    %505 = vmatpush1.xpose.msra.mxu0 0.0
    %506 = vmatprep.subr.mxu0 0.0
    %507 = vmatpush1.xpose.msra.mxu0 0.0
    %508 = vmatprep.subr.mxu0 0.0
    %509 = vmatpush1.xpose.msra.mxu0 0.0
    %510 = vmatprep.subr.mxu0 0.0
    %511 = vmatpush1.xpose.msra.mxu0 0.0
    %512 = vmatprep.subr.mxu0 0.0
    %513 = vmatpush1.xpose.msra.mxu0 0.0
    %514 = vmatprep.subr.mxu0 0.0
    %515 = vmatpush1.xpose.msra.mxu0 0.0
    %516 = vmatprep.subr.mxu0 0.0
    %517 = vmatpush1.xpose.msra.mxu0 0.0
    %518 = vmatprep.subr.mxu0 0.0
    %519 = vmatpush1.xpose.msra.mxu0 0.0
    %520 = vmatprep.subr.mxu0 0.0
    %521 = vmatpush1.xpose.msra.mxu0 0.0
    %522 = vmatprep.subr.mxu0 0.0
    %523 = vmatpush1.xpose.msra.mxu0 0.0
    %524 = vmatprep.subr.mxu0 0.0
    %525 = vmatpush1.xpose.msra.mxu0 %v492
    %526 = vmatprep.subr.mxu0 0.0
    %527 = vmatpush2.xpose.msra.mxu0 0.0
    %528 = vmatprep.subr.mxu0 0.0
    %529 = vmatpush2.xpose.msra.mxu0 0.0
    %530 = vmatprep.subr.mxu0 0.0
    %531 = vmatpush2.xpose.msra.mxu0 0.0
    %532 = vmatprep.subr.mxu0 0.0
    %533 = vmatpush2.xpose.msra.mxu0 0.0
    %534 = vmatprep.subr.mxu0 0.0
    %535 = vmatpush2.xpose.msra.mxu0 0.0
    %536 = vmatprep.subr.mxu0 0.0
    %537 = vmatpush2.xpose.msra.mxu0 0.0
    %538 = vmatprep.subr.mxu0 0.0
    %539 = vmatpush2.xpose.msra.mxu0 0.0
    %540 = vmatprep.subr.mxu0 0.0
    %541 = vmatpush2.xpose.msra.mxu0 0.0
    %542 = vmatprep.subr.mxu0 0.0
    %543 = vmatpush2.xpose.msra.mxu0 0.0
    %544 = vmatprep.subr.mxu0 0.0
    %545 = vmatpush2.xpose.msra.mxu0 0.0
    %546 = vmatprep.subr.mxu0 0.0
    %547 = vmatpush2.xpose.msra.mxu0 0.0
    %548 = vmatprep.subr.mxu0 0.0
    %549 = vmatpush2.xpose.msra.mxu0 0.0
    %550 = vmatprep.subr.mxu0 0.0
    %551 = vmatpush2.xpose.msra.mxu0 0.0
    %552 = vmatprep.subr.mxu0 0.0
    %553 = vmatpush2.xpose.msra.mxu0 0.0
    %554 = vmatprep.subr.mxu0 0.0
    %555 = vmatpush2.xpose.msra.mxu0 0.0
    %556 = vmatprep.subr.mxu0 0.0
    %557 = vmatpush2.xpose.msra.mxu0 0.0
    %558 = vmatprep.mubr.f32.mxu0 0.0
    %559 = vmatmul.mubr.f32.gmra.mxu0 %v414
    %v560 = vpop.f32.mrf.mxu0
    %v561 = vadd.f32 0.0, %v560
    %v562 = vpop.f32.mrf.mxu0
    %563 = vdwg.mxu0
    %s564 = scalar_lea.vmem [#allocation6], 2
    %565 = vst.msk [vmem:[%s564] sm:$0x3] %vm489, %v561
    // Predicated region
    $region18: #{tpu_custom_call.1} parent=1 // pred_check
      _
    $region19: #{tpu_custom_call.1} parent=1 // pred_check_branch
      %567 = sbr.rel (0) target = $region21
    $region20: #{tpu_custom_call.1} parent=1 // pred_region
      %s569 = ssub.s32 128, 128
      %570 = vsyncadd [#allocation3], %s569
      %s571 = sshll.u32 [#allocation2], 4
      %s572 = int_to_ptr.vmem [resolvable:$true] %s571
      %577 = dma.vmem_to_hbm [thread:$0]  %s572, 128, %s4, [#allocation3], 64, 64, 4
    $region21: #{tpu_custom_call.1} parent=1 // pred_fallthru
      _
    // Predicated region
    $region22: #{tpu_custom_call.1} parent=1 // pred_check
      _
    $region23: #{tpu_custom_call.1} parent=1 // pred_check_branch
      %579 = sbr.rel (0) target = $region25
    $region24: #{tpu_custom_call.1} parent=1 // pred_region
      %s581 = ssub.s32 256, 256
      %582 = vsyncadd [#allocation5], %s581
      %s583 = sshll.u32 [#allocation4], 4
      %s584 = int_to_ptr.vmem [resolvable:$true] %s583
      %589 = dma.vmem_to_hbm [thread:$0]  %s584, 256, %s5, [#allocation5], 128, 128, 8
    $region25: #{tpu_custom_call.1} parent=1 // pred_fallthru
      _
    // Predicated region
    $region26: #{tpu_custom_call.1} parent=1 // pred_check
      _
    $region27: #{tpu_custom_call.1} parent=1 // pred_check_branch
      %591 = sbr.rel (0) target = $region29
    $region28: #{tpu_custom_call.1} parent=1 // pred_region
      %s593 = ssub.s32 64, 64
      %594 = vsyncadd [#allocation5], %s593
      %s595 = sshll.u32 [#allocation6], 4
      %s596 = int_to_ptr.vmem [resolvable:$true] %s595
      %601 = dma.vmem_to_hbm [thread:$0]  %s596, 64, %s6, [#allocation5], 32, 32, 2
    $region29: #{tpu_custom_call.1} parent=1 // pred_fallthru
      _
    // Predicated region
    $region30: #{tpu_custom_call.1} parent=1 // pred_check
      _
    $region31: #{tpu_custom_call.1} parent=1 // pred_check_branch
      %603 = sbr.rel (0) target = $region33
    $region32: #{tpu_custom_call.1} parent=1 // pred_region
      %604 = dma.done [#allocation3], 128
    $region33: #{tpu_custom_call.1} parent=1 // pred_fallthru
      _
    // Predicated region
    $region34: #{tpu_custom_call.1} parent=1 // pred_check
      _
    $region35: #{tpu_custom_call.1} parent=1 // pred_check_branch
      %606 = sbr.rel (0) target = $region37
    $region36: #{tpu_custom_call.1} parent=1 // pred_region
      %607 = dma.done [#allocation5], 256
    $region37: #{tpu_custom_call.1} parent=1 // pred_fallthru
      _
    // Predicated region
    $region38: #{tpu_custom_call.1} parent=1 // pred_check
      _
    $region39: #{tpu_custom_call.1} parent=1 // pred_check_branch
      %609 = sbr.rel (0) target = $region41
    $region40: #{tpu_custom_call.1} parent=1 // pred_region
      %610 = dma.done [#allocation5], 64
    $region41: #{tpu_custom_call.1} parent=1 // pred_fallthru
      _
    %611 = vsyncpa [#allocation3], 1
    %612 = vsyncpa [#allocation5], 1

</llo_original>
